<compile_context>
chip_gen: v7x
topology: tpu7x:2x2x1
jax: 0.10.0
libtpu: 0.0.40
codegen_flags: <defaults>
</compile_context>

<pallas_src>
import jax
import jax.numpy as jnp
from jax import lax
from jax.experimental import pallas as pl
from jax.experimental.pallas import tpu as pltpu


# ----------------------------------------------------------------------------
# Kernel
# ----------------------------------------------------------------------------
def _final_layer_kernel(x_ref, c_ref, w_shift_ref, w_scale_ref, w_lin_ref,
                        b_shift_ref, b_scale_ref, b_lin_ref, out_ref):
    # x_ref / c_ref          : (tm, H) activation rows
    # w_shift/w_scale/w_lin  : (H, H) bf16, resident across the row grid
    # b_shift/b_scale/b_lin  : (1, H) f32
    # out_ref                : (tm, H)
    x = x_ref[...].astype(jnp.float32)
    c = c_ref[...].astype(jnp.float32)
    h = x.shape[-1]

    # adaLN modulation: SiLU in f32 (VPU + EUP), bf16 into the MXU, f32 accum.
    c_silu = (c * jax.nn.sigmoid(c)).astype(jnp.bfloat16)
    shift = jnp.dot(c_silu, w_shift_ref[...],
                    preferred_element_type=jnp.float32) + b_shift_ref[...]
    scale = jnp.dot(c_silu, w_scale_ref[...],
                    preferred_element_type=jnp.float32) + b_scale_ref[...]

    # LayerNorm over the hidden (lane) axis, no affine, eps=1e-6 (biased var),
    # one-pass statistics: sum and sum-of-squares together.
    inv_h = 1.0 / h
    s1 = jnp.sum(x, axis=-1, keepdims=True)
    s2 = jnp.sum(x * x, axis=-1, keepdims=True)
    mean = s1 * inv_h
    var = jnp.maximum(s2 * inv_h - mean * mean, 0.0)
    xn = (x - mean) * lax.rsqrt(var + 1e-6)

    # Modulate + final projection (bf16 LHS, bf16 resident weight, f32 accum).
    y = (xn * (1.0 + scale) + shift).astype(jnp.bfloat16)
    out = jnp.dot(y, w_lin_ref[...],
                  preferred_element_type=jnp.float32) + b_lin_ref[...]
    out_ref[...] = out.astype(out_ref.dtype)


# ----------------------------------------------------------------------------
# Tiling / wrapper
# ----------------------------------------------------------------------------
_VMEM_TILE_BUDGET = 48 * 1024 * 1024   # conservative: fits v7x's 64 MiB VMEM
_VMEM_LIMIT_BYTES = 56 * 1024 * 1024   # explicit scoped-VMEM limit (headroom)


def _round_up(v: int, mult: int) -> int:
    return ((v + mult - 1) // mult) * mult


def _pick_row_tile(m: int, h: int, budget_bytes: int = _VMEM_TILE_BUDGET) -> int:
    """VMEM-budget + MXU-shape aware row tile.

    Budget model: resident weights (3x HxH bf16 + 3x H f32 biases, counted
    double-buffered) + streamed x/c/out tiles (2 buffers each) + ~6 f32 (tm, H)
    temporaries live inside the kernel body.
    """
    resident = 2 * (3 * h * h * 2 + 3 * h * 4)
    avail = max(budget_bytes - resident, 1 << 20)
    bytes_per_row = (2 * 3 + 6) * h * 4
    max_tm = max(8, avail // bytes_per_row)

    # Prefer multiples of 256 (v6e/v7x 256x256 MXU), then 128 (v5e), then 8.
    tm = 8
    for cand in (1024, 768, 512, 384, 256, 128, 64, 32, 16, 8):
        if cand <= max_tm:
            tm = cand
            break

    # Don't pick a tile larger than the (sublane-rounded) problem itself.
    tm = min(tm, _round_up(m, 8))

    # v7x has 2 TensorCores: keep >= 2 "parallel" grid steps whenever possible.
    if m > 8 and tm >= m:
        tm = max(8, _round_up((m + 1) // 2, 8))
    return tm


def final_layer_forward(x, c, w_ada, b_ada, w_lin, b_lin):
    """Fused FinalLayer forward.

    x, c  : (B, L, H)
    w_ada : (H, 2H)  (transpose of torch Linear(H, 2H).weight)
    b_ada : (2H,)
    w_lin : (H, H)   (transpose of torch Linear(H, H).weight)
    b_lin : (H,)
    """
    b, l, h = x.shape
    m = b * l
    x2d = x.reshape(m, h)
    c2d = c.reshape(m, h)

    # Pre-split the adaLN weight/bias into shift|scale halves on the host
    # (avoids in-kernel lane-axis slicing of a (tm, 2H) MXU result) and cast
    # the weights to bf16 for the MXU.  Biases stay f32 (added to f32 accum).
    w_shift = w_ada[:, :h].astype(jnp.bfloat16)
    w_scale = w_ada[:, h:].astype(jnp.bfloat16)
    w_lin_b = w_lin.astype(jnp.bfloat16)
    b_shift = b_ada[:h].reshape(1, h).astype(jnp.float32)
    b_scale = b_ada[h:].reshape(1, h).astype(jnp.float32)
    b_lin2d = b_lin.reshape(1, h).astype(jnp.float32)

    tm = _pick_row_tile(m, h)
    m_pad = pl.cdiv(m, tm) * tm
    if m_pad != m:
        pad = m_pad - m
        x2d = jnp.pad(x2d, ((0, pad), (0, 0)))
        c2d = jnp.pad(c2d, ((0, pad), (0, 0)))
    grid = (m_pad // tm,)

    out2d = pl.pallas_call(
        _final_layer_kernel,
        out_shape=jax.ShapeDtypeStruct((m_pad, h), x.dtype),
        grid=grid,
        in_specs=[
            pl.BlockSpec((tm, h), lambda i: (i, 0)),     # x rows
            pl.BlockSpec((tm, h), lambda i: (i, 0)),     # c rows
            pl.BlockSpec((h, h), lambda i: (0, 0)),      # W_shift (resident)
            pl.BlockSpec((h, h), lambda i: (0, 0)),      # W_scale (resident)
            pl.BlockSpec((h, h), lambda i: (0, 0)),      # W_lin   (resident)
            pl.BlockSpec((1, h), lambda i: (0, 0)),      # b_shift
            pl.BlockSpec((1, h), lambda i: (0, 0)),      # b_scale
            pl.BlockSpec((1, h), lambda i: (0, 0)),      # b_lin
        ],
        out_specs=pl.BlockSpec((tm, h), lambda i: (i, 0)),
        compiler_params=pltpu.CompilerParams(
            dimension_semantics=("parallel",),
            vmem_limit_bytes=_VMEM_LIMIT_BYTES),
    )(x2d, c2d, w_shift, w_scale, w_lin_b, b_shift, b_scale, b_lin2d)

    return out2d[:m].reshape(b, l, h)


class FinalLayer:
    """JAX / Pallas re-implementation of the PyTorch FinalLayer module."""

    def __init__(self, hidden_size: int, key: jax.Array):
        self.hidden_size = hidden_size
        k1, k2, k3, k4 = jax.random.split(key, 4)
        scale = 0.02
        # Stored pre-transposed: y = x @ W + b.
        self.w_ada = scale * jax.random.normal(
            k1, (hidden_size, 2 * hidden_size), dtype=jnp.float32)
        self.b_ada = scale * jax.random.normal(
            k2, (2 * hidden_size,), dtype=jnp.float32)
        self.w_lin = scale * jax.random.normal(
            k3, (hidden_size, hidden_size), dtype=jnp.float32)
        self.b_lin = scale * jax.random.normal(
            k4, (hidden_size,), dtype=jnp.float32)

    def __call__(self, x: jax.Array, c: jax.Array) -> jax.Array:
        return final_layer_forward(x, c, self.w_ada, self.b_ada,
                                   self.w_lin, self.b_lin)


def _reference(x, c, w_ada, b_ada, w_lin, b_lin, eps=1e-6):
    """Pure-JAX f32 reference mirroring the PyTorch forward."""
    x = x.astype(jnp.float32)
    c = c.astype(jnp.float32)
    h = x.shape[-1]
    c_silu = c * jax.nn.sigmoid(c)
    mod = c_silu @ w_ada + b_ada
    shift, scale = mod[..., :h], mod[..., h:]
    mean = jnp.mean(x, axis=-1, keepdims=True)
    var = jnp.mean((x - mean) ** 2, axis=-1, keepdims=True)
    xn = (x - mean) / jnp.sqrt(var + eps)
    y = xn * (1.0 + scale) + shift
    return y @ w_lin + b_lin


if __name__ == "__main__":
    key = jax.random.PRNGKey(0)
    k_param, k_x, k_c = jax.random.split(key, 3)

    batch, seq, hidden = 2, 8, 32

    x = jax.random.normal(k_x, (batch, seq, hidden), dtype=jnp.float32)
    c = jax.random.normal(k_c, (batch, seq, hidden), dtype=jnp.float32)

    module = FinalLayer(hidden, k_param)
    out = module(x, c)
    out = jax.block_until_ready(out)

    ref = _reference(x, c, module.w_ada, module.b_ada, module.w_lin, module.b_lin)
    assert out.shape == (batch, seq, hidden), out.shape
    # bf16 MXU inputs (f32 accumulation) -> slightly looser tolerance than f32.
    assert jnp.allclose(out, ref, atol=2e-2, rtol=2e-2), (
        "mismatch vs reference; max abs diff = "
        f"{float(jnp.max(jnp.abs(out - ref)))}")

    print("KERNEL_OK")
</pallas_src>

<mosaic_0001>
module attributes {stable_mosaic.version = 11 : i64} {
  func.func @_final_layer_kernel(%arg0: i32, %arg1: memref<8x32xf32, #tpu.memory_space<vmem>>, %arg2: memref<8x32xf32, #tpu.memory_space<vmem>>, %arg3: memref<32x32xbf16, #tpu.memory_space<vmem>>, %arg4: memref<32x32xbf16, #tpu.memory_space<vmem>>, %arg5: memref<32x32xbf16, #tpu.memory_space<vmem>>, %arg6: memref<1x32xf32, #tpu.memory_space<vmem>>, %arg7: memref<1x32xf32, #tpu.memory_space<vmem>>, %arg8: memref<1x32xf32, #tpu.memory_space<vmem>>, %arg9: memref<8x32xf32, #tpu.memory_space<vmem>>) attributes {dimension_semantics = [#tpu.dimension_semantics<parallel>], iteration_bounds = array<i64: 2>, scalar_prefetch = 0 : i64, scratch_operands = 0 : i64, tpu.core_type = #tpu.core_type<tc>, window_params = [{transform_indices = @transform_0, window_bounds = array<i64: 8, 32>}, {transform_indices = @transform_1, window_bounds = array<i64: 8, 32>}, {pipeline_mode = #tpu.pipeline_mode<synchronous>, transform_indices = @transform_2, window_bounds = array<i64: 32, 32>}, {pipeline_mode = #tpu.pipeline_mode<synchronous>, transform_indices = @transform_3, window_bounds = array<i64: 32, 32>}, {pipeline_mode = #tpu.pipeline_mode<synchronous>, transform_indices = @transform_4, window_bounds = array<i64: 32, 32>}, {pipeline_mode = #tpu.pipeline_mode<synchronous>, transform_indices = @transform_5, window_bounds = array<i64: 1, 32>}, {pipeline_mode = #tpu.pipeline_mode<synchronous>, transform_indices = @transform_6, window_bounds = array<i64: 1, 32>}, {pipeline_mode = #tpu.pipeline_mode<synchronous>, transform_indices = @transform_7, window_bounds = array<i64: 1, 32>}, {transform_indices = @transform_8, window_bounds = array<i64: 8, 32>}]} {
    %c0 = arith.constant 0 : index
    %c0_0 = arith.constant 0 : index
    %0 = vector.load %arg1[%c0, %c0_0] : memref<8x32xf32, #tpu.memory_space<vmem>>, vector<8x32xf32>
    %c0_1 = arith.constant 0 : index
    %c0_2 = arith.constant 0 : index
    %1 = vector.load %arg2[%c0_1, %c0_2] : memref<8x32xf32, #tpu.memory_space<vmem>>, vector<8x32xf32>
    %2 = arith.negf %1 : vector<8x32xf32>
    %3 = math.exp %2 : vector<8x32xf32>
    %cst = arith.constant 1.000000e+00 : f32
    %4 = vector.broadcast %cst : f32 to vector<8x32xf32>
    %5 = arith.addf %4, %3 : vector<8x32xf32>
    %6 = arith.divf %4, %5 : vector<8x32xf32>
    %7 = arith.mulf %1, %6 : vector<8x32xf32>
    %8 = arith.truncf %7 : vector<8x32xf32> to vector<8x32xbf16>
    %c0_3 = arith.constant 0 : index
    %c0_4 = arith.constant 0 : index
    %9 = vector.load %arg3[%c0_3, %c0_4] : memref<32x32xbf16, #tpu.memory_space<vmem>>, vector<32x32xbf16>
    %cst_5 = arith.constant dense<0.000000e+00> : vector<8x32xf32>
    %10 = tpu.matmul %8, %9, %cst_5 {dimension_numbers = #tpu.dot_dimension_numbers<[1], [0], [0], [1], [0, 0, 1, 1], [], []>} : vector<8x32xbf16>, vector<32x32xbf16>, vector<8x32xf32> -> vector<8x32xf32>
    %c0_6 = arith.constant 0 : index
    %c0_7 = arith.constant 0 : index
    %11 = vector.load %arg6[%c0_6, %c0_7] : memref<1x32xf32, #tpu.memory_space<vmem>>, vector<1x32xf32>
    %12 = vector.broadcast %11 : vector<1x32xf32> to vector<8x32xf32>
    %13 = arith.addf %10, %12 : vector<8x32xf32>
    %c0_8 = arith.constant 0 : index
    %c0_9 = arith.constant 0 : index
    %14 = vector.load %arg4[%c0_8, %c0_9] : memref<32x32xbf16, #tpu.memory_space<vmem>>, vector<32x32xbf16>
    %cst_10 = arith.constant dense<0.000000e+00> : vector<8x32xf32>
    %15 = tpu.matmul %8, %14, %cst_10 {dimension_numbers = #tpu.dot_dimension_numbers<[1], [0], [0], [1], [0, 0, 1, 1], [], []>} : vector<8x32xbf16>, vector<32x32xbf16>, vector<8x32xf32> -> vector<8x32xf32>
    %c0_11 = arith.constant 0 : index
    %c0_12 = arith.constant 0 : index
    %16 = vector.load %arg7[%c0_11, %c0_12] : memref<1x32xf32, #tpu.memory_space<vmem>>, vector<1x32xf32>
    %17 = vector.broadcast %16 : vector<1x32xf32> to vector<8x32xf32>
    %18 = arith.addf %15, %17 : vector<8x32xf32>
    %cst_13 = arith.constant dense<0.000000e+00> : vector<8xf32>
    %19 = vector.multi_reduction <add>, %0, %cst_13 [1] : vector<8x32xf32> to vector<8xf32>
    %20 = vector.shape_cast %19 : vector<8xf32> to vector<8x1xf32>
    %21 = arith.mulf %0, %0 : vector<8x32xf32>
    %cst_14 = arith.constant dense<0.000000e+00> : vector<8xf32>
    %22 = vector.multi_reduction <add>, %21, %cst_14 [1] : vector<8x32xf32> to vector<8xf32>
    %23 = vector.shape_cast %22 : vector<8xf32> to vector<8x1xf32>
    %cst_15 = arith.constant 3.125000e-02 : f32
    %24 = vector.broadcast %cst_15 : f32 to vector<8x1xf32>
    %25 = arith.mulf %20, %24 : vector<8x1xf32>
    %cst_16 = arith.constant 3.125000e-02 : f32
    %26 = vector.broadcast %cst_16 : f32 to vector<8x1xf32>
    %27 = arith.mulf %23, %26 : vector<8x1xf32>
    %28 = arith.mulf %25, %25 : vector<8x1xf32>
    %29 = arith.subf %27, %28 : vector<8x1xf32>
    %cst_17 = arith.constant 0.000000e+00 : f32
    %30 = vector.broadcast %cst_17 : f32 to vector<8x1xf32>
    %31 = arith.maximumf %29, %30 : vector<8x1xf32>
    %32 = vector.broadcast %25 : vector<8x1xf32> to vector<8x32xf32>
    %33 = arith.subf %0, %32 : vector<8x32xf32>
    %cst_18 = arith.constant 9.99999997E-7 : f32
    %34 = vector.broadcast %cst_18 : f32 to vector<8x1xf32>
    %35 = arith.addf %31, %34 : vector<8x1xf32>
    %36 = math.rsqrt %35 : vector<8x1xf32>
    %37 = vector.broadcast %36 : vector<8x1xf32> to vector<8x32xf32>
    %38 = arith.mulf %33, %37 : vector<8x32xf32>
    %cst_19 = arith.constant 1.000000e+00 : f32
    %39 = vector.broadcast %cst_19 : f32 to vector<8x32xf32>
    %40 = arith.addf %39, %18 : vector<8x32xf32>
    %41 = arith.mulf %38, %40 : vector<8x32xf32>
    %42 = arith.addf %41, %13 : vector<8x32xf32>
    %43 = arith.truncf %42 : vector<8x32xf32> to vector<8x32xbf16>
    %c0_20 = arith.constant 0 : index
    %c0_21 = arith.constant 0 : index
    %44 = vector.load %arg5[%c0_20, %c0_21] : memref<32x32xbf16, #tpu.memory_space<vmem>>, vector<32x32xbf16>
    %cst_22 = arith.constant dense<0.000000e+00> : vector<8x32xf32>
    %45 = tpu.matmul %43, %44, %cst_22 {dimension_numbers = #tpu.dot_dimension_numbers<[1], [0], [0], [1], [0, 0, 1, 1], [], []>} : vector<8x32xbf16>, vector<32x32xbf16>, vector<8x32xf32> -> vector<8x32xf32>
    %c0_23 = arith.constant 0 : index
    %c0_24 = arith.constant 0 : index
    %46 = vector.load %arg8[%c0_23, %c0_24] : memref<1x32xf32, #tpu.memory_space<vmem>>, vector<1x32xf32>
    %47 = vector.broadcast %46 : vector<1x32xf32> to vector<8x32xf32>
    %48 = arith.addf %45, %47 : vector<8x32xf32>
    %c0_25 = arith.constant 0 : index
    %c0_26 = arith.constant 0 : index
    %49 = vector.load %arg9[%c0_25, %c0_26] : memref<8x32xf32, #tpu.memory_space<vmem>>, vector<8x32xf32>
    tpu.vector_store %arg9[%c0_25, %c0_26], %48 {strides = array<i32>} : memref<8x32xf32, #tpu.memory_space<vmem>>, vector<8x32xf32>,
    return
  }
  func.func @transform_0(%arg0: i32) -> (i32, i32) {
    %c0_i32 = arith.constant 0 : i32
    %c0_i32_0 = arith.constant 0 : i32
    return %arg0, %c0_i32 : i32, i32
  }
  func.func @transform_1(%arg0: i32) -> (i32, i32) {
    %c0_i32 = arith.constant 0 : i32
    %c0_i32_0 = arith.constant 0 : i32
    return %arg0, %c0_i32 : i32, i32
  }
  func.func @transform_2(%arg0: i32) -> (i32, i32) {
    %c0_i32 = arith.constant 0 : i32
    %c0_i32_0 = arith.constant 0 : i32
    %c0_i32_1 = arith.constant 0 : i32
    return %c0_i32, %c0_i32_0 : i32, i32
  }
  func.func @transform_3(%arg0: i32) -> (i32, i32) {
    %c0_i32 = arith.constant 0 : i32
    %c0_i32_0 = arith.constant 0 : i32
    %c0_i32_1 = arith.constant 0 : i32
    return %c0_i32, %c0_i32_0 : i32, i32
  }
  func.func @transform_4(%arg0: i32) -> (i32, i32) {
    %c0_i32 = arith.constant 0 : i32
    %c0_i32_0 = arith.constant 0 : i32
    %c0_i32_1 = arith.constant 0 : i32
    return %c0_i32, %c0_i32_0 : i32, i32
  }
  func.func @transform_5(%arg0: i32) -> (i32, i32) {
    %c0_i32 = arith.constant 0 : i32
    %c0_i32_0 = arith.constant 0 : i32
    %c0_i32_1 = arith.constant 0 : i32
    return %c0_i32, %c0_i32_0 : i32, i32
  }
  func.func @transform_6(%arg0: i32) -> (i32, i32) {
    %c0_i32 = arith.constant 0 : i32
    %c0_i32_0 = arith.constant 0 : i32
    %c0_i32_1 = arith.constant 0 : i32
    return %c0_i32, %c0_i32_0 : i32, i32
  }
  func.func @transform_7(%arg0: i32) -> (i32, i32) {
    %c0_i32 = arith.constant 0 : i32
    %c0_i32_0 = arith.constant 0 : i32
    %c0_i32_1 = arith.constant 0 : i32
    return %c0_i32, %c0_i32_0 : i32, i32
  }
  func.func @transform_8(%arg0: i32) -> (i32, i32) {
    %c0_i32 = arith.constant 0 : i32
    %c0_i32_0 = arith.constant 0 : i32
    return %arg0, %c0_i32 : i32, i32
  }
}

</mosaic_0001>

<llo_original>
// kernel: tpu_custom_call.1
$region0: #{tpu_custom_call.1}
  #allocation0 [shape = 'u32[]', space=smem, size = 0x4, offset = 0x4, fixed_abs, tag = 'smem constant byte address 0x4 - core index']
  #allocation1 [shape = 'u32[144,128]{1,0:T(1,128)}', space=vmem, size = 0x12000, scoped, tag = 'internal scratch']
  %s0 = inlined_call_operand.hbm [shape: f32[16,32], index: 0, kind: input, shape index: {}]
  %s1 = inlined_call_operand.hbm [shape: f32[16,32], index: 1, kind: input, shape index: {}]
  %s2 = inlined_call_operand.hbm [shape: bf16[32,32], index: 2, kind: input, shape index: {}]
  %s3 = inlined_call_operand.hbm [shape: bf16[32,32], index: 3, kind: input, shape index: {}]
  %s4 = inlined_call_operand.hbm [shape: bf16[32,32], index: 4, kind: input, shape index: {}]
  %s5 = inlined_call_operand.vmem [shape: f32[1,32], index: 5, kind: input, shape index: {}]
  %s6 = inlined_call_operand.vmem [shape: f32[1,32], index: 6, kind: input, shape index: {}]
  %s7 = inlined_call_operand.vmem [shape: f32[1,32], index: 7, kind: input, shape index: {}]
  %s8 = inlined_call_operand.hbm [shape: f32[16,32], index: 8, kind: output, shape index: {}]
  %s9 = sld [smem:[#allocation0]]
  $region85: #{tpu_custom_call.1} parent=0
    _
  %s11 = ssub.s32 1, %s9
  %s12 = scalar_select 0, %s11, %s9
  $region1: #{tpu_custom_call.1} parent=0
    #allocation2 [shape = 'u8[8192]{0}', space=vmem, size = 0x2000, scoped, tag = 'input window, operand 0']
    #allocation3 [shape = 's32[2]{0}', space=sflag, size = 0x8, scoped, tag = 'scoped memory for tpu_custom_call.1']
    #allocation4 [shape = 's32[2]{0}', space=sflag, size = 0x8, scoped, tag = 'scoped memory for tpu_custom_call.1']
    #allocation5 [shape = 'u8[8192]{0}', space=vmem, size = 0x2000, scoped, tag = 'input window, operand 1']
    #allocation6 [shape = 's32[2]{0}', space=sflag, size = 0x8, scoped, tag = 'scoped memory for tpu_custom_call.1']
    #allocation7 [shape = 'u8[8192]{0}', space=vmem, size = 0x2000, scoped, tag = 'input window, operand 2, single buffered']
    #allocation8 [shape = 'u8[8192]{0}', space=vmem, size = 0x2000, scoped, tag = 'input window, operand 3, single buffered']
    #allocation9 [shape = 's32[1]{0}', space=sflag, size = 0x4, scoped, tag = 'scoped memory for tpu_custom_call.1']
    #allocation10 [shape = 'u8[8192]{0}', space=vmem, size = 0x2000, scoped, tag = 'input window, operand 4, single buffered']
    #allocation11 [shape = 'u8[8192]{0}', space=vmem, size = 0x2000, scoped, tag = 'output window, operand 0']
    %13 = vsyncpa [#allocation3], 0
    %s14 = scalar_lea.sflag [#allocation3], 1
    %15 = vsyncpa %s14, 0
    %16 = vsyncpa [#allocation6], 0
    %s17 = scalar_lea.sflag [#allocation6], 1
    %18 = vsyncpa %s17, 0
    %19 = vsyncpa [#allocation9], 0
    %20 = vsyncpa [#allocation4], 0
    %s21 = scalar_lea.sflag [#allocation4], 1
    %22 = vsyncpa %s21, 0
    loop: start=0, step=1, limit=4
    $region2: #{tpu_custom_call.1} parent=1 // loop_pre_header
      _
    $region3: #{tpu_custom_call.1} parent=1 // loop_header
      %s24 = sphi 0, %s28
      %p25 = scmp.ge.s32.totalorder %s24, 4
      %s34 = sphi 0, %s36
      %s37 = sphi 0, %s34
      %s38 = sphi 0, %s37
      %s54 = sphi 0, %s38
      %s60 = sphi 0, %s62
      %s63 = sphi 0, %s60
      %s64 = sphi 0, %s63
      %s80 = sphi 0, %s64
      %s84 = sphi 0, %s84
      %s86 = sphi 0, %s84
      %s87 = sphi 0, %s86
      %s101 = sphi 0, %s87
      %s105 = sphi 0, %s105
      %s107 = sphi 0, %s105
      %s108 = sphi 0, %s107
      %s122 = sphi 0, %s108
      %s126 = sphi 0, %s126
      %s128 = sphi 0, %s126
      %s129 = sphi 0, %s128
      %s143 = sphi 0, %s129
      %s147 = sphi 0, %s147
      %s149 = sphi 0, %s147
      %s150 = sphi 0, %s149
      %s164 = sphi 0, %s150
      %s168 = sphi 0, %s168
      %s170 = sphi 0, %s168
      %s171 = sphi 0, %s170
      %s185 = sphi 0, %s171
      %s189 = sphi 0, %s189
      %s191 = sphi 0, %s189
      %s192 = sphi 0, %s191
      %s206 = sphi 0, %s192
      %s212 = sphi 0, %s214
      %s215 = sphi 0, %s212
      %s216 = sphi 0, %s215
      %s232 = sphi 0, %s216
    $region4: #{tpu_custom_call.1} parent=1 // loop_header_branch
      %27 = sbr.rel (%p25) target = $region8
    $region5: #{tpu_custom_call.1} parent=1 // loop_body
      %s29 = ssub.s32 %s24, 1
      %s30 = ssub.s32 %s24, 2
      %s31 = sadd.s32 %s24, 1
      %s32 = ssub.s32 %s24, %s31
      %p33 = scmp.eq.s32.totalorder %s32, 0
      %s35 = sadd.s32 %s34, 1
      %s36 = scalar_select %p33, %s34, %s35
      %p39 = pneg %p33
      %p40 = scmp.eq.s32.totalorder %s24, 1
      %p41 = por %p39, %p40
      %p42 = scmp.ne.s32.totalorder %s34, %s37
      %p43 = scmp.eq.s32.totalorder %s24, 0
      %p44 = por %p42, %p43
      %p45 = scmp.ne.s32.totalorder %s34, %s37
      %p46 = scmp.eq.s32.totalorder %s29, 1
      %p47 = por %p45, %p46
      %p48 = scmp.ne.s32.totalorder %s37, %s38
      %p49 = scmp.eq.s32.totalorder %s29, 0
      %p50 = por %p48, %p49
      %p51 = scmp.ne.s32.totalorder %s37, %s38
      %p52 = scmp.eq.s32.totalorder %s30, 1
      %p53 = por %p51, %p52
      %p55 = scmp.ne.s32.totalorder %s38, %s54
      %p56 = scmp.eq.s32.totalorder %s30, 0
      %p57 = por %p55, %p56
      %s58 = ssub.s32 %s24, %s31
      %p59 = scmp.eq.s32.totalorder %s58, 0
      %s61 = sadd.s32 %s60, 1
      %s62 = scalar_select %p59, %s60, %s61
      %p65 = pneg %p59
      %p66 = scmp.eq.s32.totalorder %s24, 1
      %p67 = por %p65, %p66
      %p68 = scmp.ne.s32.totalorder %s60, %s63
      %p69 = scmp.eq.s32.totalorder %s24, 0
      %p70 = por %p68, %p69
      %p71 = scmp.ne.s32.totalorder %s60, %s63
      %p72 = scmp.eq.s32.totalorder %s29, 1
      %p73 = por %p71, %p72
      %p74 = scmp.ne.s32.totalorder %s63, %s64
      %p75 = scmp.eq.s32.totalorder %s29, 0
      %p76 = por %p74, %p75
      %p77 = scmp.ne.s32.totalorder %s63, %s64
      %p78 = scmp.eq.s32.totalorder %s30, 1
      %p79 = por %p77, %p78
      %p81 = scmp.ne.s32.totalorder %s64, %s80
      %p82 = scmp.eq.s32.totalorder %s30, 0
      %p83 = por %p81, %p82
      %s85 = sadd.s32 %s84, 1
      %p88 = scmp.eq.s32.totalorder %s24, 1
      %p89 = scmp.ne.s32.totalorder %s84, %s86
      %p90 = scmp.eq.s32.totalorder %s24, 0
      %p91 = por %p89, %p90
      %p92 = scmp.ne.s32.totalorder %s84, %s86
      %p93 = scmp.eq.s32.totalorder %s29, 1
      %p94 = por %p92, %p93
      %p95 = scmp.ne.s32.totalorder %s86, %s87
      %p96 = scmp.eq.s32.totalorder %s29, 0
      %p97 = por %p95, %p96
      %p98 = scmp.ne.s32.totalorder %s86, %s87
      %p99 = scmp.eq.s32.totalorder %s30, 1
      %p100 = por %p98, %p99
      %p102 = scmp.ne.s32.totalorder %s87, %s101
      %p103 = scmp.eq.s32.totalorder %s30, 0
      %p104 = por %p102, %p103
      %s106 = sadd.s32 %s105, 1
      %p109 = scmp.eq.s32.totalorder %s24, 1
      %p110 = scmp.ne.s32.totalorder %s105, %s107
      %p111 = scmp.eq.s32.totalorder %s24, 0
      %p112 = por %p110, %p111
      %p113 = scmp.ne.s32.totalorder %s105, %s107
      %p114 = scmp.eq.s32.totalorder %s29, 1
      %p115 = por %p113, %p114
      %p116 = scmp.ne.s32.totalorder %s107, %s108
      %p117 = scmp.eq.s32.totalorder %s29, 0
      %p118 = por %p116, %p117
      %p119 = scmp.ne.s32.totalorder %s107, %s108
      %p120 = scmp.eq.s32.totalorder %s30, 1
      %p121 = por %p119, %p120
      %p123 = scmp.ne.s32.totalorder %s108, %s122
      %p124 = scmp.eq.s32.totalorder %s30, 0
      %p125 = por %p123, %p124
      %s127 = sadd.s32 %s126, 1
      %p130 = scmp.eq.s32.totalorder %s24, 1
      %p131 = scmp.ne.s32.totalorder %s126, %s128
      %p132 = scmp.eq.s32.totalorder %s24, 0
      %p133 = por %p131, %p132
      %p134 = scmp.ne.s32.totalorder %s126, %s128
      %p135 = scmp.eq.s32.totalorder %s29, 1
      %p136 = por %p134, %p135
      %p137 = scmp.ne.s32.totalorder %s128, %s129
      %p138 = scmp.eq.s32.totalorder %s29, 0
      %p139 = por %p137, %p138
      %p140 = scmp.ne.s32.totalorder %s128, %s129
      %p141 = scmp.eq.s32.totalorder %s30, 1
      %p142 = por %p140, %p141
      %p144 = scmp.ne.s32.totalorder %s129, %s143
      %p145 = scmp.eq.s32.totalorder %s30, 0
      %p146 = por %p144, %p145
      %s148 = sadd.s32 %s147, 1
      %p151 = scmp.eq.s32.totalorder %s24, 1
      %p152 = scmp.ne.s32.totalorder %s147, %s149
      %p153 = scmp.eq.s32.totalorder %s24, 0
      %p154 = por %p152, %p153
      %p155 = scmp.ne.s32.totalorder %s147, %s149
      %p156 = scmp.eq.s32.totalorder %s29, 1
      %p157 = por %p155, %p156
      %p158 = scmp.ne.s32.totalorder %s149, %s150
      %p159 = scmp.eq.s32.totalorder %s29, 0
      %p160 = por %p158, %p159
      %p161 = scmp.ne.s32.totalorder %s149, %s150
      %p162 = scmp.eq.s32.totalorder %s30, 1
      %p163 = por %p161, %p162
      %p165 = scmp.ne.s32.totalorder %s150, %s164
      %p166 = scmp.eq.s32.totalorder %s30, 0
      %p167 = por %p165, %p166
      %s169 = sadd.s32 %s168, 1
      %p172 = scmp.eq.s32.totalorder %s24, 1
      %p173 = scmp.ne.s32.totalorder %s168, %s170
      %p174 = scmp.eq.s32.totalorder %s24, 0
      %p175 = por %p173, %p174
      %p176 = scmp.ne.s32.totalorder %s168, %s170
      %p177 = scmp.eq.s32.totalorder %s29, 1
      %p178 = por %p176, %p177
      %p179 = scmp.ne.s32.totalorder %s170, %s171
      %p180 = scmp.eq.s32.totalorder %s29, 0
      %p181 = por %p179, %p180
      %p182 = scmp.ne.s32.totalorder %s170, %s171
      %p183 = scmp.eq.s32.totalorder %s30, 1
      %p184 = por %p182, %p183
      %p186 = scmp.ne.s32.totalorder %s171, %s185
      %p187 = scmp.eq.s32.totalorder %s30, 0
      %p188 = por %p186, %p187
      %s190 = sadd.s32 %s189, 1
      %p193 = scmp.eq.s32.totalorder %s24, 1
      %p194 = scmp.ne.s32.totalorder %s189, %s191
      %p195 = scmp.eq.s32.totalorder %s24, 0
      %p196 = por %p194, %p195
      %p197 = scmp.ne.s32.totalorder %s189, %s191
      %p198 = scmp.eq.s32.totalorder %s29, 1
      %p199 = por %p197, %p198
      %p200 = scmp.ne.s32.totalorder %s191, %s192
      %p201 = scmp.eq.s32.totalorder %s29, 0
      %p202 = por %p200, %p201
      %p203 = scmp.ne.s32.totalorder %s191, %s192
      %p204 = scmp.eq.s32.totalorder %s30, 1
      %p205 = por %p203, %p204
      %p207 = scmp.ne.s32.totalorder %s192, %s206
      %p208 = scmp.eq.s32.totalorder %s30, 0
      %p209 = por %p207, %p208
      %s210 = ssub.s32 %s24, %s31
      %p211 = scmp.eq.s32.totalorder %s210, 0
      %s213 = sadd.s32 %s212, 1
      %s214 = scalar_select %p211, %s212, %s213
      %p217 = pneg %p211
      %p218 = scmp.eq.s32.totalorder %s24, 1
      %p219 = por %p217, %p218
      %p220 = scmp.ne.s32.totalorder %s212, %s215
      %p221 = scmp.eq.s32.totalorder %s24, 0
      %p222 = por %p220, %p221
      %p223 = scmp.ne.s32.totalorder %s212, %s215
      %p224 = scmp.eq.s32.totalorder %s29, 1
      %p225 = por %p223, %p224
      %p226 = scmp.ne.s32.totalorder %s215, %s216
      %p227 = scmp.eq.s32.totalorder %s29, 0
      %p228 = por %p226, %p227
      %p229 = scmp.ne.s32.totalorder %s215, %s216
      %p230 = scmp.eq.s32.totalorder %s30, 1
      %p231 = por %p229, %p230
      %p233 = scmp.ne.s32.totalorder %s216, %s232
      %p234 = scmp.eq.s32.totalorder %s30, 0
      %p235 = por %p233, %p234
      %p236 = scmp.le.s32.totalorder 1, %s24
      %p237 = scmp.lt.s32.totalorder %s24, 3
      %p238 = pnand %p236, %p237
      %p239 = pneg %p238
      // Predicated region
      $region9: #{tpu_custom_call.1} parent=5 // pred_check
        _
      $region10: #{tpu_custom_call.1} parent=5 // pred_check_branch
        %241 = sbr.rel (%p238) target = $region12
      $region11: #{tpu_custom_call.1} parent=5 // pred_region
        %s242 = ssub.s32 %s24, 1
        // Predicated region
        $region13: #{tpu_custom_call.1} parent=11 // pred_check
          %p243 = pneg %p97
        $region14: #{tpu_custom_call.1} parent=11 // pred_check_branch
          %245 = sbr.rel (%p243) target = $region16
        $region15: #{tpu_custom_call.1} parent=11 // pred_region
          %s247 = ssub.s32 256, 256
          %248 = vsyncadd [#allocation6], %s247
          %s249 = sshll.u32 [#allocation7], 4
          %s250 = int_to_ptr.vmem [resolvable:$true] %s249
          %255 = dma.hbm_to_vmem [thread:$0]  %s2, 256, %s250, [#allocation6], 64, 64, 4
        $region16: #{tpu_custom_call.1} parent=11 // pred_fallthru
          _
        // Predicated region
        $region17: #{tpu_custom_call.1} parent=11 // pred_check
          %p256 = pneg %p118
        $region18: #{tpu_custom_call.1} parent=11 // pred_check_branch
          %258 = sbr.rel (%p256) target = $region20
        $region19: #{tpu_custom_call.1} parent=11 // pred_region
          %s260 = ssub.s32 256, 256
          %261 = vsyncadd [#allocation9], %s260
          %s262 = sshll.u32 [#allocation8], 4
          %s263 = int_to_ptr.vmem [resolvable:$true] %s262
          %268 = dma.hbm_to_vmem [thread:$0]  %s3, 256, %s263, [#allocation9], 64, 64, 4
        $region20: #{tpu_custom_call.1} parent=11 // pred_fallthru
          _
        // Predicated region
        $region21: #{tpu_custom_call.1} parent=11 // pred_check
          %p269 = pneg %p139
        $region22: #{tpu_custom_call.1} parent=11 // pred_check_branch
          %271 = sbr.rel (%p269) target = $region24
        $region23: #{tpu_custom_call.1} parent=11 // pred_region
          %s273 = ssub.s32 256, 256
          %274 = vsyncadd [#allocation9], %s273
          %s275 = sshll.u32 [#allocation10], 4
          %s276 = int_to_ptr.vmem [resolvable:$true] %s275
          %281 = dma.hbm_to_vmem [thread:$0]  %s4, 256, %s276, [#allocation9], 64, 64, 4
        $region24: #{tpu_custom_call.1} parent=11 // pred_fallthru
          _
        // Predicated region
        $region25: #{tpu_custom_call.1} parent=11 // pred_check
          %p282 = pneg %p160
        $region26: #{tpu_custom_call.1} parent=11 // pred_check_branch
          %284 = sbr.rel (%p282) target = $region28
        $region27: #{tpu_custom_call.1} parent=11 // pred_region
          _
        $region28: #{tpu_custom_call.1} parent=11 // pred_fallthru
          _
        // Predicated region
        $region29: #{tpu_custom_call.1} parent=11 // pred_check
          %p285 = pneg %p181
        $region30: #{tpu_custom_call.1} parent=11 // pred_check_branch
          %287 = sbr.rel (%p285) target = $region32
        $region31: #{tpu_custom_call.1} parent=11 // pred_region
          _
        $region32: #{tpu_custom_call.1} parent=11 // pred_fallthru
          _
        // Predicated region
        $region33: #{tpu_custom_call.1} parent=11 // pred_check
          %p288 = pneg %p202
        $region34: #{tpu_custom_call.1} parent=11 // pred_check_branch
          %290 = sbr.rel (%p288) target = $region36
        $region35: #{tpu_custom_call.1} parent=11 // pred_region
          _
        $region36: #{tpu_custom_call.1} parent=11 // pred_fallthru
          _
      $region12: #{tpu_custom_call.1} parent=5 // pred_fallthru
        _
      %p291 = scmp.lt.s32.totalorder %s24, 2
      // Predicated region
      $region37: #{tpu_custom_call.1} parent=5 // pred_check
        %p292 = pneg %p291
      $region38: #{tpu_custom_call.1} parent=5 // pred_check_branch
        %294 = sbr.rel (%p292) target = $region40
      $region39: #{tpu_custom_call.1} parent=5 // pred_region
        // Predicated region
        $region41: #{tpu_custom_call.1} parent=39 // pred_check
          %p295 = pneg %p44
        $region42: #{tpu_custom_call.1} parent=39 // pred_check_branch
          %297 = sbr.rel (%p295) target = $region44
        $region43: #{tpu_custom_call.1} parent=39 // pred_region
          %s298 = sand.u32 %s34, 1
          %s299 = scalar_lea.sflag [#allocation3], %s298
          %s300 = sand.u32 %s34, 1
          %s301 = smul.addr %s300, 8
          %s302 = scalar_lea.vmem [#allocation2], %s301
          %s304 = ssub.s32 128, 128
          %305 = vsyncadd %s299, %s304
          %s306 = smul.addr %s24, 128
          %s307 = scalar_lea.hbm %s0, %s306
          %s309 = sshll.u32 %s302, 4
          %s310 = int_to_ptr.vmem [resolvable:$true] %s309
          %312 = dma.hbm_to_vmem [thread:$0]  %s307, 128, %s310, %s299
        $region44: #{tpu_custom_call.1} parent=39 // pred_fallthru
          _
        // Predicated region
        $region45: #{tpu_custom_call.1} parent=39 // pred_check
          %p313 = pneg %p70
        $region46: #{tpu_custom_call.1} parent=39 // pred_check_branch
          %315 = sbr.rel (%p313) target = $region48
        $region47: #{tpu_custom_call.1} parent=39 // pred_region
          %s316 = sand.u32 %s24, 1
          %s317 = scalar_lea.sflag [#allocation6], %s316
          %s318 = sand.u32 %s60, 1
          %s319 = smul.addr %s318, 8
          %s320 = scalar_lea.vmem [#allocation5], %s319
          %s322 = ssub.s32 128, 128
          %323 = vsyncadd %s317, %s322
          %s324 = smul.addr %s24, 128
          %s325 = scalar_lea.hbm %s1, %s324
          %s327 = sshll.u32 %s320, 4
          %s328 = int_to_ptr.vmem [resolvable:$true] %s327
          %330 = dma.hbm_to_vmem [thread:$0]  %s325, 128, %s328, %s317
        $region48: #{tpu_custom_call.1} parent=39 // pred_fallthru
          _
      $region40: #{tpu_custom_call.1} parent=5 // pred_fallthru
        _
      %p331 = scmp.le.s32.totalorder 1, %s24
      %p332 = scmp.lt.s32.totalorder %s24, 3
      %p333 = pnand %p331, %p332
      %p334 = pneg %p333
      // Predicated region
      $region49: #{tpu_custom_call.1} parent=5 // pred_check
        _
      $region50: #{tpu_custom_call.1} parent=5 // pred_check_branch
        %336 = sbr.rel (%p333) target = $region52
      $region51: #{tpu_custom_call.1} parent=5 // pred_region
        %s337 = ssub.s32 %s24, 1
        %s338 = sand.u32 %s37, 1
        %s339 = scalar_lea.sflag [#allocation3], %s338
        %s340 = sand.u32 %s37, 1
        %s341 = smul.addr %s340, 8
        %s342 = scalar_lea.vmem [#allocation2], %s341
        // Predicated region
        $region53: #{tpu_custom_call.1} parent=51 // pred_check
          %p343 = pneg %p50
        $region54: #{tpu_custom_call.1} parent=51 // pred_check_branch
          %345 = sbr.rel (%p343) target = $region56
        $region55: #{tpu_custom_call.1} parent=51 // pred_region
          %346 = dma.done %s339, 128
        $region56: #{tpu_custom_call.1} parent=51 // pred_fallthru
          _
        %s347 = sand.u32 %s29, 1
        %s348 = scalar_lea.sflag [#allocation6], %s347
        %s349 = sand.u32 %s63, 1
        %s350 = smul.addr %s349, 8
        %s351 = scalar_lea.vmem [#allocation5], %s350
        // Predicated region
        $region57: #{tpu_custom_call.1} parent=51 // pred_check
          %p352 = pneg %p76
        $region58: #{tpu_custom_call.1} parent=51 // pred_check_branch
          %354 = sbr.rel (%p352) target = $region60
        $region59: #{tpu_custom_call.1} parent=51 // pred_region
          %355 = dma.done %s348, 128
        $region60: #{tpu_custom_call.1} parent=51 // pred_fallthru
          _
        // Predicated region
        $region61: #{tpu_custom_call.1} parent=51 // pred_check
          %p356 = pneg %p97
        $region62: #{tpu_custom_call.1} parent=51 // pred_check_branch
          %358 = sbr.rel (%p356) target = $region64
        $region63: #{tpu_custom_call.1} parent=51 // pred_region
          %359 = dma.done [#allocation6], 256
        $region64: #{tpu_custom_call.1} parent=51 // pred_fallthru
          _
        // Predicated region
        $region65: #{tpu_custom_call.1} parent=51 // pred_check
          %p360 = pneg %p118
        $region66: #{tpu_custom_call.1} parent=51 // pred_check_branch
          %362 = sbr.rel (%p360) target = $region68
        $region67: #{tpu_custom_call.1} parent=51 // pred_region
          %363 = dma.done [#allocation9], 256
        $region68: #{tpu_custom_call.1} parent=51 // pred_fallthru
          _
        // Predicated region
        $region69: #{tpu_custom_call.1} parent=51 // pred_check
          %p364 = pneg %p139
        $region70: #{tpu_custom_call.1} parent=51 // pred_check_branch
          %366 = sbr.rel (%p364) target = $region72
        $region71: #{tpu_custom_call.1} parent=51 // pred_region
          %367 = dma.done [#allocation9], 256
        $region72: #{tpu_custom_call.1} parent=51 // pred_fallthru
          _
        %s368 = sand.u32 %s37, 1
        %s369 = scalar_lea.sflag [#allocation3], %s368
        %s370 = sand.u32 %s37, 1
        %s371 = smul.addr %s370, 8
        %s372 = scalar_lea.vmem [#allocation2], %s371
        %p373 = pneg %p50
        %p374 = pneg %p47
        %s375 = sand.u32 %s29, 1
        %s376 = scalar_lea.sflag [#allocation6], %s375
        %s377 = sand.u32 %s63, 1
        %s378 = smul.addr %s377, 8
        %s379 = scalar_lea.vmem [#allocation5], %s378
        %p380 = pneg %p76
        %p381 = pneg %p73
        %p382 = pneg %p97
        %p383 = pneg %p94
        %p384 = pneg %p118
        %p385 = pneg %p115
        %p386 = pneg %p139
        %p387 = pneg %p136
        %p388 = pneg %p160
        %p389 = pneg %p157
        %p390 = pneg %p181
        %p391 = pneg %p178
        %p392 = pneg %p202
        %p393 = pneg %p199
        %p394 = pneg %p228
        %p395 = pneg %p225
        %s396 = sand.u32 %s215, 1
        %s397 = scalar_lea.sflag [#allocation4], %s396
        %s398 = sand.u32 %s215, 1
        %s399 = smul.addr %s398, 8
        %s400 = scalar_lea.vmem [#allocation11], %s399
        %v402 = vld [vmem:[%s342] sm:$0xff]
        %v403 = vld [vmem:[%s351] sm:$0xff]
        %v404 = vxor.u32 %v403, 2147483648
        %v405 = vmul.f32 %v404, 1.442695
        %v406 = vpow.pop %v405
        %v407 = vadd.f32 %v406, 1.0
        %v408 = vrcp.pop %v407
        %v409 = vmul.f32 1.0, %v408
        %v410 = vmul.f32 %v403, %v409
        %v411 = vpack.c.bf16 %v410, %v410
        %v412 = vld [vmem:[#allocation7] sm:$0xf]
        %v413 = vld [vmem:[#allocation7 + $0x4] sm:$0xf]
        %v414 = vld [vmem:[#allocation7 + $0x8] sm:$0xf]
        %v415 = vld [vmem:[#allocation7 + $0xc] sm:$0xf]
        %v416 = vld [vmem:[%s5] sm:$0x1]
        %v418 = vlaneseq
        %v419 = vshrl.u32 %v418, 7
        %v420 = vsub.s32 0, %v419
        %v421 = vrot.slane %v416, %v420
        %v427 = vunpack.c.l.b16 %v412
        %v428 = vunpack.c.l.b16 %v413
        %v429 = vunpack.c.l.b16 %v414
        %v430 = vunpack.c.l.b16 %v415
        %v431 = vpack.c.b16 %v428, %v427
        %v432 = vpack.c.b16 %v430, %v429
        %vm435 = vcmask 261120
        %v437 = vsel %vm435, %v411, 0
        %439 = vmatprep.subr.bf16.mxu0 0
        %440 = vmatpush1.bf16.msra.mxu0 %v431
        %441 = vmatprep.subr.bf16.mxu0 0
        %442 = vmatpush1.bf16.msra.mxu0 %v432
        %443 = vmatprep.subr.bf16.mxu0 0
        %444 = vmatpush1.bf16.msra.mxu0 0
        %445 = vmatprep.subr.bf16.mxu0 0
        %446 = vmatpush1.bf16.msra.mxu0 0
        %447 = vmatprep.subr.bf16.mxu0 0
        %448 = vmatpush1.bf16.msra.mxu0 0
        %449 = vmatprep.subr.bf16.mxu0 0
        %450 = vmatpush1.bf16.msra.mxu0 0
        %451 = vmatprep.subr.bf16.mxu0 0
        %452 = vmatpush1.bf16.msra.mxu0 0
        %453 = vmatprep.subr.bf16.mxu0 0
        %454 = vmatpush1.bf16.msra.mxu0 0
        %455 = vmatprep.subr.bf16.mxu0 0
        %456 = vmatpush1.bf16.msra.mxu0 0
        %457 = vmatprep.subr.bf16.mxu0 0
        %458 = vmatpush1.bf16.msra.mxu0 0
        %459 = vmatprep.subr.bf16.mxu0 0
        %460 = vmatpush1.bf16.msra.mxu0 0
        %461 = vmatprep.subr.bf16.mxu0 0
        %462 = vmatpush1.bf16.msra.mxu0 0
        %463 = vmatprep.subr.bf16.mxu0 0
        %464 = vmatpush1.bf16.msra.mxu0 0
        %465 = vmatprep.subr.bf16.mxu0 0
        %466 = vmatpush1.bf16.msra.mxu0 0
        %467 = vmatprep.subr.bf16.mxu0 0
        %468 = vmatpush1.bf16.msra.mxu0 0
        %469 = vmatprep.subr.bf16.mxu0 0
        %470 = vmatpush1.bf16.msra.mxu0 0
        %471 = vmatprep.mubr.bf16.mxu0 0
        %472 = vmatmul.mubr.bf16.gmra.mrb[0].mxu0 %v437
        %v473 = vpop.f32.mrb[0].mxu0
        %v474 = vadd.f32 %v421, %v473
        %v475 = vpop.f32.mrb[0].mxu0
        %v476 = vpop.f32.mrb[0].mxu0
        %v477 = vpop.f32.mrb[0].mxu0
        %478 = vdwg.mxu0
        %v479 = vld [vmem:[#allocation8] sm:$0xf]
        %v480 = vld [vmem:[#allocation8 + $0x4] sm:$0xf]
        %v481 = vld [vmem:[#allocation8 + $0x8] sm:$0xf]
        %v482 = vld [vmem:[#allocation8 + $0xc] sm:$0xf]
        %v483 = vld [vmem:[%s6] sm:$0x1]
        %v485 = vlaneseq
        %v486 = vshrl.u32 %v485, 7
        %v487 = vsub.s32 0, %v486
        %v488 = vrot.slane %v483, %v487
        %v494 = vunpack.c.l.b16 %v479
        %v495 = vunpack.c.l.b16 %v480
        %v496 = vunpack.c.l.b16 %v481
        %v497 = vunpack.c.l.b16 %v482
        %v498 = vpack.c.b16 %v495, %v494
        %v499 = vpack.c.b16 %v497, %v496
        %502 = vmatprep.subr.bf16.mxu0 0
        %503 = vmatpush1.bf16.msra.mxu0 %v498
        %504 = vmatprep.subr.bf16.mxu0 0
        %505 = vmatpush1.bf16.msra.mxu0 %v499
        %506 = vmatprep.subr.bf16.mxu0 0
        %507 = vmatpush1.bf16.msra.mxu0 0
        %508 = vmatprep.subr.bf16.mxu0 0
        %509 = vmatpush1.bf16.msra.mxu0 0
        %510 = vmatprep.subr.bf16.mxu0 0
        %511 = vmatpush1.bf16.msra.mxu0 0
        %512 = vmatprep.subr.bf16.mxu0 0
        %513 = vmatpush1.bf16.msra.mxu0 0
        %514 = vmatprep.subr.bf16.mxu0 0
        %515 = vmatpush1.bf16.msra.mxu0 0
        %516 = vmatprep.subr.bf16.mxu0 0
        %517 = vmatpush1.bf16.msra.mxu0 0
        %518 = vmatprep.subr.bf16.mxu0 0
        %519 = vmatpush1.bf16.msra.mxu0 0
        %520 = vmatprep.subr.bf16.mxu0 0
        %521 = vmatpush1.bf16.msra.mxu0 0
        %522 = vmatprep.subr.bf16.mxu0 0
        %523 = vmatpush1.bf16.msra.mxu0 0
        %524 = vmatprep.subr.bf16.mxu0 0
        %525 = vmatpush1.bf16.msra.mxu0 0
        %526 = vmatprep.subr.bf16.mxu0 0
        %527 = vmatpush1.bf16.msra.mxu0 0
        %528 = vmatprep.subr.bf16.mxu0 0
        %529 = vmatpush1.bf16.msra.mxu0 0
        %530 = vmatprep.subr.bf16.mxu0 0
        %531 = vmatpush1.bf16.msra.mxu0 0
        %532 = vmatprep.subr.bf16.mxu0 0
        %533 = vmatpush1.bf16.msra.mxu0 0
        %534 = vmatprep.mubr.bf16.mxu0 0
        %535 = vmatmul.mubr.bf16.gmra.mrb[0].mxu0 %v437
        %v536 = vpop.f32.mrb[0].mxu0
        %v537 = vadd.f32 %v488, %v536
        %v538 = vpop.f32.mrb[0].mxu0
        %v539 = vpop.f32.mrb[0].mxu0
        %v540 = vpop.f32.mrb[0].mxu0
        %541 = vdwg.mxu0
        %v542 = vsel %vm435, %v402, 0.0
        %543 = vadd.xlane.f32.xlu0 %v542
        %v544 = vpop.xlane.xlu0 %543
        %v545 = vmul.f32 %v402, %v402
        %v546 = vsel %vm435, %v545, 0.0
        %547 = vadd.xlane.f32.xlu0 %v546
        %v548 = vpop.xlane.xlu0 %547
        %v549 = vmul.f32 %v544, 0.03125
        %v550 = vmul.f32 %v548, 0.03125
        %v551 = vmul.f32 %v549, %v549
        %v552 = vsub.f32 %v550, %v551
        %v553 = vmax.f32 %v552, 0.0
        %v554 = vsub.f32 %v402, %v549
        %v555 = vadd.f32 %v553, 1e-06
        %v556 = vrsqrt.pop %v555
        %v557 = vmul.f32 %v554, %v556
        %v558 = vadd.f32 %v537, 1.0
        %v559 = vmul.f32 %v557, %v558
        %v560 = vadd.f32 %v559, %v474
        %v561 = vpack.c.bf16 %v560, %v560
        %v562 = vld [vmem:[#allocation10] sm:$0xf]
        %v563 = vld [vmem:[#allocation10 + $0x4] sm:$0xf]
        %v564 = vld [vmem:[#allocation10 + $0x8] sm:$0xf]
        %v565 = vld [vmem:[#allocation10 + $0xc] sm:$0xf]
        %v566 = vld [vmem:[%s7] sm:$0x1]
        %v568 = vlaneseq
        %v569 = vshrl.u32 %v568, 7
        %v570 = vsub.s32 0, %v569
        %v571 = vrot.slane %v566, %v570
        %v577 = vunpack.c.l.b16 %v562
        %v578 = vunpack.c.l.b16 %v563
        %v579 = vunpack.c.l.b16 %v564
        %v580 = vunpack.c.l.b16 %v565
        %v581 = vpack.c.b16 %v578, %v577
        %v582 = vpack.c.b16 %v580, %v579
        %v586 = vsel %vm435, %v561, 0
        %588 = vmatprep.subr.bf16.mxu0 0
        %589 = vmatpush1.bf16.msra.mxu0 %v581
        %590 = vmatprep.subr.bf16.mxu0 0
        %591 = vmatpush1.bf16.msra.mxu0 %v582
        %592 = vmatprep.subr.bf16.mxu0 0
        %593 = vmatpush1.bf16.msra.mxu0 0
        %594 = vmatprep.subr.bf16.mxu0 0
        %595 = vmatpush1.bf16.msra.mxu0 0
        %596 = vmatprep.subr.bf16.mxu0 0
        %597 = vmatpush1.bf16.msra.mxu0 0
        %598 = vmatprep.subr.bf16.mxu0 0
        %599 = vmatpush1.bf16.msra.mxu0 0
        %600 = vmatprep.subr.bf16.mxu0 0
        %601 = vmatpush1.bf16.msra.mxu0 0
        %602 = vmatprep.subr.bf16.mxu0 0
        %603 = vmatpush1.bf16.msra.mxu0 0
        %604 = vmatprep.subr.bf16.mxu0 0
        %605 = vmatpush1.bf16.msra.mxu0 0
        %606 = vmatprep.subr.bf16.mxu0 0
        %607 = vmatpush1.bf16.msra.mxu0 0
        %608 = vmatprep.subr.bf16.mxu0 0
        %609 = vmatpush1.bf16.msra.mxu0 0
        %610 = vmatprep.subr.bf16.mxu0 0
        %611 = vmatpush1.bf16.msra.mxu0 0
        %612 = vmatprep.subr.bf16.mxu0 0
        %613 = vmatpush1.bf16.msra.mxu0 0
        %614 = vmatprep.subr.bf16.mxu0 0
        %615 = vmatpush1.bf16.msra.mxu0 0
        %616 = vmatprep.subr.bf16.mxu0 0
        %617 = vmatpush1.bf16.msra.mxu0 0
        %618 = vmatprep.subr.bf16.mxu0 0
        %619 = vmatpush1.bf16.msra.mxu0 0
        %620 = vmatprep.mubr.bf16.mxu0 0
        %621 = vmatmul.mubr.bf16.gmra.mrb[0].mxu0 %v586
        %v622 = vpop.f32.mrb[0].mxu0
        %v623 = vadd.f32 %v571, %v622
        %v624 = vpop.f32.mrb[0].mxu0
        %v625 = vpop.f32.mrb[0].mxu0
        %v626 = vpop.f32.mrb[0].mxu0
        %627 = vdwg.mxu0
        %628 = vst.msk [vmem:[%s400] sm:$0xff] %vm435, %v623
        %s629 = sand.u32 %s215, 1
        %s630 = scalar_lea.sflag [#allocation4], %s629
        %s631 = sand.u32 %s215, 1
        %s632 = smul.addr %s631, 8
        %s633 = scalar_lea.vmem [#allocation11], %s632
        // Predicated region
        $region73: #{tpu_custom_call.1} parent=51 // pred_check
          %p634 = pneg %p225
        $region74: #{tpu_custom_call.1} parent=51 // pred_check_branch
          %636 = sbr.rel (%p634) target = $region76
        $region75: #{tpu_custom_call.1} parent=51 // pred_region
          %s638 = ssub.s32 128, 128
          %639 = vsyncadd %s630, %s638
          %s640 = smul.addr %s29, 128
          %s641 = scalar_lea.hbm %s8, %s640
          %s643 = sshll.u32 %s633, 4
          %s644 = int_to_ptr.vmem [resolvable:$true] %s643
          %646 = dma.vmem_to_hbm [thread:$0]  %s644, 128, %s641, %s630
        $region76: #{tpu_custom_call.1} parent=51 // pred_fallthru
          _
      $region52: #{tpu_custom_call.1} parent=5 // pred_fallthru
        _
      %p647 = scmp.le.s32.totalorder 2, %s24
      // Predicated region
      $region77: #{tpu_custom_call.1} parent=5 // pred_check
        %p648 = pneg %p647
      $region78: #{tpu_custom_call.1} parent=5 // pred_check_branch
        %650 = sbr.rel (%p648) target = $region80
      $region79: #{tpu_custom_call.1} parent=5 // pred_region
        %s651 = ssub.s32 %s24, 2
        // Predicated region
        $region81: #{tpu_custom_call.1} parent=79 // pred_check
          %p652 = pneg %p231
        $region82: #{tpu_custom_call.1} parent=79 // pred_check_branch
          %654 = sbr.rel (%p652) target = $region84
        $region83: #{tpu_custom_call.1} parent=79 // pred_region
          %s655 = sand.u32 %s216, 1
          %s656 = scalar_lea.sflag [#allocation4], %s655
          %s657 = sand.u32 %s216, 1
          %s658 = smul.addr %s657, 8
          %s659 = scalar_lea.vmem [#allocation11], %s658
          %660 = dma.done %s656, 128
        $region84: #{tpu_custom_call.1} parent=79 // pred_fallthru
          _
      $region80: #{tpu_custom_call.1} parent=5 // pred_fallthru
        _
    $region6: #{tpu_custom_call.1} parent=1 // loop_footer
      %s28 = sadd.s32 1, %s24
    $region7: #{tpu_custom_call.1} parent=1 // loop_footer_branch
      %23 = sbr.rel target = $region3
    $region8: #{tpu_custom_call.1} parent=1 // loop_exit
      _
    %661 = vsyncpa [#allocation3], 1
    %s662 = scalar_lea.sflag [#allocation3], 1
    %663 = vsyncpa %s662, 1
    %664 = vsyncpa [#allocation6], 1
    %s665 = scalar_lea.sflag [#allocation6], 1
    %666 = vsyncpa %s665, 1
    %667 = vsyncpa [#allocation9], 1
    %668 = vsyncpa [#allocation4], 1
    %s669 = scalar_lea.sflag [#allocation4], 1
    %670 = vsyncpa %s669, 1

</llo_original>
